<compile_context>
chip_gen: v5e
topology: v5e:2x2
jax: 0.10.0
libtpu: 0.0.40
codegen_flags: <defaults>
</compile_context>

<pallas_src>
import jax
import jax.numpy as jnp
from jax.experimental import pallas as pl
from jax.experimental.pallas import tpu as pltpu


def _outconv_kernel(x_ref, w_ref, b_ref, o_ref):
    # x_ref: (Cin, t)   w_ref: (Cout, Cin)   b_ref: (Cout, 1)   o_ref: (Cout, t)
    acc = jnp.dot(w_ref[...], x_ref[...], preferred_element_type=jnp.float32)
    # Single f32 bias add + one cast in the epilogue (keeps VALU work minimal).
    o_ref[...] = (acc + b_ref[...].astype(jnp.float32)).astype(o_ref.dtype)


def outconv_pallas(x_nchw, weight, bias, *, t_hw=512):
    """1x1 Conv2d forward.

    x_nchw : (N, Cin, H, W)
    weight : (Cout, Cin, 1, 1)   (PyTorch conv weight layout)
    bias   : (Cout,)
    returns (N, Cout, H, W)
    """
    N, Cin, H, W = x_nchw.shape
    Cout = weight.shape[0]
    HW = H * W

    # Free, contiguous views — no transposes, no pad/slice copies.
    x3 = x_nchw.reshape(N, Cin, HW)          # (N, Cin, HW)
    w_mat = weight.reshape(Cout, Cin)        # (Cout, Cin)
    b_mat = bias.reshape(Cout, 1)            # (Cout, 1)

    # Spatial tile: must be a multiple of 128 (lane dim) or the full extent.
    if HW <= t_hw:
        t = HW
    else:
        t = max(128, (t_hw // 128) * 128)
    grid = (N, pl.cdiv(HW, t))               # Pallas handles the ragged last block.

    # VMEM budget: double-buffered X and Y tiles + resident W/bias, 2x headroom.
    # (Re-derived per-call so the tile also fits v7x's smaller 64 MiB VMEM.)
    def _pad(a, m):
        return ((a + m - 1) // m) * m

    itemsize = jnp.dtype(x3.dtype).itemsize
    t_lanes = _pad(t, 128)
    tile_bytes = (
        2 * _pad(Cin, 8) * t_lanes * itemsize        # X double buffer
        + 2 * _pad(Cout, 8) * t_lanes * itemsize     # Y double buffer
        + _pad(Cout, 8) * _pad(Cin, 128) * itemsize  # W (resident)
        + _pad(Cout, 8) * 128 * itemsize             # bias (resident)
    )
    vmem_limit = int(min(max(2 * tile_bytes, 16 << 20), 48 << 20))

    out = pl.pallas_call(
        _outconv_kernel,
        out_shape=jax.ShapeDtypeStruct((N, Cout, HW), x3.dtype),
        grid_spec=pltpu.PrefetchScalarGridSpec(
            num_scalar_prefetch=0,
            grid=grid,
            in_specs=[
                # X: (Cin, t) tile, batch dim squeezed.
                pl.BlockSpec((None, Cin, t), lambda n, j: (n, 0, j)),
                # Weight: constant across the grid -> DMA'd once, stays resident.
                pl.BlockSpec((Cout, Cin), lambda n, j: (0, 0)),
                # Bias: constant across the grid.
                pl.BlockSpec((Cout, 1), lambda n, j: (0, 0)),
            ],
            # Lane-dense output block: (Cout, t) with t a multiple of 128 (or HW).
            out_specs=pl.BlockSpec((None, Cout, t), lambda n, j: (n, 0, j)),
        ),
        compiler_params=pltpu.CompilerParams(
            dimension_semantics=("parallel", "parallel"),
            vmem_limit_bytes=vmem_limit,
        ),
    )(x3, w_mat, b_mat)

    # Free reshape straight back to NCHW (no transpose needed).
    return out.reshape(N, Cout, H, W)


if __name__ == "__main__":
    key = jax.random.PRNGKey(0)
    kx, kw, kb = jax.random.split(key, 3)

    N, Cin, Cout, H, W = 2, 4, 3, 16, 16
    x = jax.random.normal(kx, (N, Cin, H, W), dtype=jnp.float32)
    # Deterministic synthetic parameters (Conv2d(in=4, out=3, kernel_size=1)).
    weight = jax.random.normal(kw, (Cout, Cin, 1, 1), dtype=jnp.float32) * 0.1
    bias = jax.random.normal(kb, (Cout,), dtype=jnp.float32) * 0.1

    y = outconv_pallas(x, weight, bias)
    y = jax.block_until_ready(y)

    # Pure-JAX reference: 1x1 conv == einsum over channels + bias.
    y_ref = jnp.einsum("nchw,oc->nohw", x, weight.reshape(Cout, Cin)) \
        + bias.reshape(1, Cout, 1, 1)
    assert y.shape == (N, Cout, H, W)
    assert jnp.allclose(y, y_ref, atol=1e-5, rtol=1e-5)

    print("KERNEL_OK")
</pallas_src>

<mosaic_0001>
module attributes {stable_mosaic.version = 11 : i64} {
  func.func @_outconv_kernel(%arg0: i32, %arg1: i32, %arg2: memref<1x4x256xf32, #tpu.memory_space<vmem>>, %arg3: memref<3x4xf32, #tpu.memory_space<vmem>>, %arg4: memref<3x1xf32, #tpu.memory_space<vmem>>, %arg5: memref<1x3x256xf32, #tpu.memory_space<vmem>>) attributes {dimension_semantics = [#tpu.dimension_semantics<parallel>, #tpu.dimension_semantics<parallel>], iteration_bounds = array<i64: 2, 1>, scalar_prefetch = 0 : i64, scratch_operands = 0 : i64, tpu.core_type = #tpu.core_type<tc>, window_params = [{transform_indices = @transform_0, window_bounds = array<i64: 1, 4, 256>}, {pipeline_mode = #tpu.pipeline_mode<synchronous>, transform_indices = @transform_1, window_bounds = array<i64: 3, 4>}, {pipeline_mode = #tpu.pipeline_mode<synchronous>, transform_indices = @transform_2, window_bounds = array<i64: 3, 1>}, {transform_indices = @transform_3, window_bounds = array<i64: 1, 3, 256>}]} {
    %c0 = arith.constant 0 : index
    %c0_0 = arith.constant 0 : index
    %0 = vector.load %arg3[%c0, %c0_0] : memref<3x4xf32, #tpu.memory_space<vmem>>, vector<3x4xf32>
    %c0_1 = arith.constant 0 : index
    %c0_2 = arith.constant 0 : index
    %c0_3 = arith.constant 0 : index
    %1 = vector.load %arg2[%c0_1, %c0_2, %c0_3] : memref<1x4x256xf32, #tpu.memory_space<vmem>>, vector<1x4x256xf32>
    %2 = vector.shape_cast %1 : vector<1x4x256xf32> to vector<4x256xf32>
    %cst = arith.constant dense<0.000000e+00> : vector<3x256xf32>
    %3 = tpu.matmul %0, %2, %cst {dimension_numbers = #tpu.dot_dimension_numbers<[1], [0], [0], [1], [0, 0, 1, 1], [], []>} : vector<3x4xf32>, vector<4x256xf32>, vector<3x256xf32> -> vector<3x256xf32>
    %c0_4 = arith.constant 0 : index
    %c0_5 = arith.constant 0 : index
    %4 = vector.load %arg4[%c0_4, %c0_5] : memref<3x1xf32, #tpu.memory_space<vmem>>, vector<3x1xf32>
    %5 = vector.broadcast %4 : vector<3x1xf32> to vector<3x256xf32>
    %6 = arith.addf %3, %5 : vector<3x256xf32>
    %c0_6 = arith.constant 0 : index
    %c0_7 = arith.constant 0 : index
    %c0_8 = arith.constant 0 : index
    %7 = vector.load %arg5[%c0_6, %c0_7, %c0_8] : memref<1x3x256xf32, #tpu.memory_space<vmem>>, vector<1x3x256xf32>
    %8 = vector.shape_cast %7 : vector<1x3x256xf32> to vector<3x256xf32>
    %9 = vector.shape_cast %6 : vector<3x256xf32> to vector<1x3x256xf32>
    tpu.vector_store %arg5[%c0_6, %c0_7, %c0_8], %9 {strides = array<i32>} : memref<1x3x256xf32, #tpu.memory_space<vmem>>, vector<1x3x256xf32>,
    return
  }
  func.func @transform_0(%arg0: i32, %arg1: i32) -> (i32, i32, i32) {
    %c0_i32 = arith.constant 0 : i32
    %c0_i32_0 = arith.constant 0 : i32
    return %arg0, %c0_i32, %arg1 : i32, i32, i32
  }
  func.func @transform_1(%arg0: i32, %arg1: i32) -> (i32, i32) {
    %c0_i32 = arith.constant 0 : i32
    %c0_i32_0 = arith.constant 0 : i32
    %c0_i32_1 = arith.constant 0 : i32
    return %c0_i32, %c0_i32_0 : i32, i32
  }
  func.func @transform_2(%arg0: i32, %arg1: i32) -> (i32, i32) {
    %c0_i32 = arith.constant 0 : i32
    %c0_i32_0 = arith.constant 0 : i32
    %c0_i32_1 = arith.constant 0 : i32
    return %c0_i32, %c0_i32_0 : i32, i32
  }
  func.func @transform_3(%arg0: i32, %arg1: i32) -> (i32, i32, i32) {
    %c0_i32 = arith.constant 0 : i32
    %c0_i32_0 = arith.constant 0 : i32
    return %arg0, %c0_i32, %arg1 : i32, i32, i32
  }
}

</mosaic_0001>

<llo_original>
// kernel: tpu_custom_call.1
$region0: #{tpu_custom_call.1}
  #allocation0 [shape = 'u32[]', space=smem, size = 0x4, offset = 0x4, fixed_abs, tag = 'smem constant byte address 0x4 - core index']
  #allocation1 [shape = 'u32[72,128]{1,0:T(1,128)}', space=vmem, size = 0x9000, scoped, tag = 'internal scratch']
  %s0 = inlined_call_operand.hbm [shape: f32[2,4,256], index: 0, kind: input, shape index: {}]
  %s1 = inlined_call_operand.vmem [shape: f32[3,4], index: 1, kind: input, shape index: {}]
  %s2 = inlined_call_operand.vmem [shape: f32[3,1], index: 2, kind: input, shape index: {}]
  %s3 = inlined_call_operand.vmem [shape: f32[2,3,256], index: 3, kind: output, shape index: {}]
  %s4 = sld [smem:[#allocation0]]
  $region49: #{tpu_custom_call.1} parent=0
    _
  %s6 = ssub.s32 1, %s4
  %s7 = scalar_select 0, %s6, %s4
  $region1: #{tpu_custom_call.1} parent=0
    #allocation2 [shape = 'u8[8192]{0}', space=vmem, size = 0x2000, scoped, tag = 'input window, operand 0']
    #allocation3 [shape = 's32[2]{0}', space=sflag, size = 0x8, scoped, tag = 'scoped memory for tpu_custom_call.1']
    %8 = vsyncpa [#allocation3], 0
    %s9 = scalar_lea.sflag [#allocation3], 1
    %10 = vsyncpa %s9, 0
    loop: start=0, step=1, limit=4
    $region2: #{tpu_custom_call.1} parent=1 // loop_pre_header
      _
    $region3: #{tpu_custom_call.1} parent=1 // loop_header
      %s12 = sphi 0, %s16
      %p13 = scmp.ge.s32.totalorder %s12, 4
      %s19 = sphi 0, %s31
      %s20 = sphi 0, %s27
      %s21 = sphi 0, %s19
      %s22 = sphi 0, %s20
      %s23 = sphi 0, %s21
      %s24 = sphi 0, %s22
      %s36 = sphi 0, %s38
      %s39 = sphi 0, %s36
      %s40 = sphi 0, %s39
      %s56 = sphi 0, %s40
      %s60 = sphi 0, %s60
      %s62 = sphi 0, %s60
      %s63 = sphi 0, %s62
      %s77 = sphi 0, %s63
      %s81 = sphi 0, %s81
      %s83 = sphi 0, %s81
      %s84 = sphi 0, %s83
      %s98 = sphi 0, %s84
      %s106 = sphi 0, %s108
      %s109 = sphi 0, %s106
      %s110 = sphi 0, %s109
      %s126 = sphi 0, %s110
    $region4: #{tpu_custom_call.1} parent=1 // loop_header_branch
      %15 = sbr.rel (%p13) target = $region8
    $region5: #{tpu_custom_call.1} parent=1 // loop_body
      %s17 = ssub.s32 %s12, 1
      %s18 = ssub.s32 %s12, 2
      %s25 = sadd.s32 1, %s20
      %p26 = scmp.ge.s32.totalorder %s25, 1
      %s27 = scalar_select %p26, 0, %s25
      %s28 = sadd.s32 1, %s19
      %s29 = scalar_select %p26, %s28, %s19
      %p30 = scmp.ge.s32.totalorder %s29, 2
      %s31 = scalar_select %p30, 0, %s29
      %s32 = ssub.s32 %s19, %s31
      %s33 = ssub.s32 %s20, %s27
      %s34 = sor.u32 %s32, %s33
      %p35 = scmp.eq.s32.totalorder %s34, 0
      %s37 = sadd.s32 %s36, 1
      %s38 = scalar_select %p35, %s36, %s37
      %p41 = pneg %p35
      %p42 = scmp.eq.s32.totalorder %s12, 1
      %p43 = por %p41, %p42
      %p44 = scmp.ne.s32.totalorder %s36, %s39
      %p45 = scmp.eq.s32.totalorder %s12, 0
      %p46 = por %p44, %p45
      %p47 = scmp.ne.s32.totalorder %s36, %s39
      %p48 = scmp.eq.s32.totalorder %s17, 1
      %p49 = por %p47, %p48
      %p50 = scmp.ne.s32.totalorder %s39, %s40
      %p51 = scmp.eq.s32.totalorder %s17, 0
      %p52 = por %p50, %p51
      %p53 = scmp.ne.s32.totalorder %s39, %s40
      %p54 = scmp.eq.s32.totalorder %s18, 1
      %p55 = por %p53, %p54
      %p57 = scmp.ne.s32.totalorder %s40, %s56
      %p58 = scmp.eq.s32.totalorder %s18, 0
      %p59 = por %p57, %p58
      %s61 = sadd.s32 %s60, 1
      %p64 = scmp.eq.s32.totalorder %s12, 1
      %p65 = scmp.ne.s32.totalorder %s60, %s62
      %p66 = scmp.eq.s32.totalorder %s12, 0
      %p67 = por %p65, %p66
      %p68 = scmp.ne.s32.totalorder %s60, %s62
      %p69 = scmp.eq.s32.totalorder %s17, 1
      %p70 = por %p68, %p69
      %p71 = scmp.ne.s32.totalorder %s62, %s63
      %p72 = scmp.eq.s32.totalorder %s17, 0
      %p73 = por %p71, %p72
      %p74 = scmp.ne.s32.totalorder %s62, %s63
      %p75 = scmp.eq.s32.totalorder %s18, 1
      %p76 = por %p74, %p75
      %p78 = scmp.ne.s32.totalorder %s63, %s77
      %p79 = scmp.eq.s32.totalorder %s18, 0
      %p80 = por %p78, %p79
      %s82 = sadd.s32 %s81, 1
      %p85 = scmp.eq.s32.totalorder %s12, 1
      %p86 = scmp.ne.s32.totalorder %s81, %s83
      %p87 = scmp.eq.s32.totalorder %s12, 0
      %p88 = por %p86, %p87
      %p89 = scmp.ne.s32.totalorder %s81, %s83
      %p90 = scmp.eq.s32.totalorder %s17, 1
      %p91 = por %p89, %p90
      %p92 = scmp.ne.s32.totalorder %s83, %s84
      %p93 = scmp.eq.s32.totalorder %s17, 0
      %p94 = por %p92, %p93
      %p95 = scmp.ne.s32.totalorder %s83, %s84
      %p96 = scmp.eq.s32.totalorder %s18, 1
      %p97 = por %p95, %p96
      %p99 = scmp.ne.s32.totalorder %s84, %s98
      %p100 = scmp.eq.s32.totalorder %s18, 0
      %p101 = por %p99, %p100
      %s102 = ssub.s32 %s19, %s31
      %s103 = ssub.s32 %s20, %s27
      %s104 = sor.u32 %s102, %s103
      %p105 = scmp.eq.s32.totalorder %s104, 0
      %s107 = sadd.s32 %s106, 1
      %s108 = scalar_select %p105, %s106, %s107
      %p111 = pneg %p105
      %p112 = scmp.eq.s32.totalorder %s12, 1
      %p113 = por %p111, %p112
      %p114 = scmp.ne.s32.totalorder %s106, %s109
      %p115 = scmp.eq.s32.totalorder %s12, 0
      %p116 = por %p114, %p115
      %p117 = scmp.ne.s32.totalorder %s106, %s109
      %p118 = scmp.eq.s32.totalorder %s17, 1
      %p119 = por %p117, %p118
      %p120 = scmp.ne.s32.totalorder %s109, %s110
      %p121 = scmp.eq.s32.totalorder %s17, 0
      %p122 = por %p120, %p121
      %p123 = scmp.ne.s32.totalorder %s109, %s110
      %p124 = scmp.eq.s32.totalorder %s18, 1
      %p125 = por %p123, %p124
      %p127 = scmp.ne.s32.totalorder %s110, %s126
      %p128 = scmp.eq.s32.totalorder %s18, 0
      %p129 = por %p127, %p128
      %p130 = scmp.le.s32.totalorder 1, %s12
      %p131 = scmp.lt.s32.totalorder %s12, 3
      %p132 = pnand %p130, %p131
      %p133 = pneg %p132
      // Predicated region
      $region9: #{tpu_custom_call.1} parent=5 // pred_check
        _
      $region10: #{tpu_custom_call.1} parent=5 // pred_check_branch
        %135 = sbr.rel (%p132) target = $region12
      $region11: #{tpu_custom_call.1} parent=5 // pred_region
        %s136 = ssub.s32 %s12, 1
        // Predicated region
        $region13: #{tpu_custom_call.1} parent=11 // pred_check
          %p137 = pneg %p73
        $region14: #{tpu_custom_call.1} parent=11 // pred_check_branch
          %139 = sbr.rel (%p137) target = $region16
        $region15: #{tpu_custom_call.1} parent=11 // pred_region
          _
        $region16: #{tpu_custom_call.1} parent=11 // pred_fallthru
          _
        // Predicated region
        $region17: #{tpu_custom_call.1} parent=11 // pred_check
          %p140 = pneg %p94
        $region18: #{tpu_custom_call.1} parent=11 // pred_check_branch
          %142 = sbr.rel (%p140) target = $region20
        $region19: #{tpu_custom_call.1} parent=11 // pred_region
          _
        $region20: #{tpu_custom_call.1} parent=11 // pred_fallthru
          _
      $region12: #{tpu_custom_call.1} parent=5 // pred_fallthru
        _
      %p143 = scmp.lt.s32.totalorder %s12, 2
      // Predicated region
      $region21: #{tpu_custom_call.1} parent=5 // pred_check
        %p144 = pneg %p143
      $region22: #{tpu_custom_call.1} parent=5 // pred_check_branch
        %146 = sbr.rel (%p144) target = $region24
      $region23: #{tpu_custom_call.1} parent=5 // pred_region
        // Predicated region
        $region25: #{tpu_custom_call.1} parent=23 // pred_check
          %p147 = pneg %p46
        $region26: #{tpu_custom_call.1} parent=23 // pred_check_branch
          %149 = sbr.rel (%p147) target = $region28
        $region27: #{tpu_custom_call.1} parent=23 // pred_region
          %s150 = sand.u32 %s36, 1
          %s151 = scalar_lea.sflag [#allocation3], %s150
          %s152 = sand.u32 %s36, 1
          %s153 = smul.addr %s152, 8
          %s154 = scalar_lea.vmem [#allocation2], %s153
          %s155 = smul.u32 2, %s20
          %157 = vsyncadd %s151, 0
          %s158 = smul.addr %s19, 2
          %s159 = sadd.s32 %s155, %s158
          %s160 = smul.addr %s159, 4
          %s161 = scalar_lea.hbm %s0, %s160
          %s163 = sshll.u32 %s161, 4
          %s164 = int_to_ptr.hbm [resolvable:$true] %s163
          %s165 = sshll.u32 %s154, 4
          %s166 = int_to_ptr.vmem [resolvable:$true] %s165
          %168 = dma.hbm_to_vmem [thread:$0]  %s164, 128, %s166, %s151
        $region28: #{tpu_custom_call.1} parent=23 // pred_fallthru
          _
      $region24: #{tpu_custom_call.1} parent=5 // pred_fallthru
        _
      %p169 = scmp.le.s32.totalorder 1, %s12
      %p170 = scmp.lt.s32.totalorder %s12, 3
      %p171 = pnand %p169, %p170
      %p172 = pneg %p171
      // Predicated region
      $region29: #{tpu_custom_call.1} parent=5 // pred_check
        _
      $region30: #{tpu_custom_call.1} parent=5 // pred_check_branch
        %174 = sbr.rel (%p171) target = $region32
      $region31: #{tpu_custom_call.1} parent=5 // pred_region
        %s175 = ssub.s32 %s12, 1
        %s176 = sand.u32 %s39, 1
        %s177 = scalar_lea.sflag [#allocation3], %s176
        %s178 = sand.u32 %s39, 1
        %s179 = smul.addr %s178, 8
        %s180 = scalar_lea.vmem [#allocation2], %s179
        // Predicated region
        $region33: #{tpu_custom_call.1} parent=31 // pred_check
          %p181 = pneg %p52
        $region34: #{tpu_custom_call.1} parent=31 // pred_check_branch
          %183 = sbr.rel (%p181) target = $region36
        $region35: #{tpu_custom_call.1} parent=31 // pred_region
          %185 = dma.done %s177, 128
        $region36: #{tpu_custom_call.1} parent=31 // pred_fallthru
          _
        %s186 = sand.u32 %s39, 1
        %s187 = scalar_lea.sflag [#allocation3], %s186
        %s188 = sand.u32 %s39, 1
        %s189 = smul.addr %s188, 8
        %s190 = scalar_lea.vmem [#allocation2], %s189
        %p191 = pneg %p52
        %p192 = pneg %p49
        %p193 = pneg %p73
        %p194 = pneg %p70
        %p195 = pneg %p94
        %p196 = pneg %p91
        %p197 = pneg %p122
        %p198 = pneg %p119
        %s199 = smul.u32 2, %s22
        %p200 = scmp.lt.s32.totalorder %s21, 1
        %s201 = scalar_select %p200, %s21, 1
        %p202 = scmp.lt.s32.totalorder %s199, 1
        %s203 = scalar_select %p202, %s199, 1
        %s204 = smul.addr %s201, 2
        %s205 = sadd.s32 %s203, %s204
        %s206 = smul.addr %s205, 4
        %s207 = scalar_lea.vmem %s3, %s206
        %s208 = smul.u32 2, %s22
        %s209 = smul.u32 2, %s22
        %p210 = scmp.lt.s32.totalorder %s21, 1
        %s211 = scalar_select %p210, %s21, 1
        %p212 = scmp.lt.s32.totalorder %s209, 1
        %s213 = scalar_select %p212, %s209, 1
        %s214 = smul.addr %s211, 2
        %s215 = sadd.s32 %s213, %s214
        %s216 = smul.addr %s215, 4
        %s217 = scalar_lea.vmem %s3, %s216
        %s218 = smul.u32 2, %s22
        %v219 = vld [vmem:[%s1] sm:$0x7]
        %v220 = vld [vmem:[%s180] sm:$0xff]
        %v221 = vld [vmem:[%s2] sm:$0x7]
        %223 = vset.pattern.permute.xlu0 0
        %224 = vperm.xlu0 %223, %v221
        %v225 = vpop.permute.xlu0 %224
        %228 = vst [vmem:[#allocation1] ss:$2 sm:$0xff] %v220
        %v229 = vld.sshfl [vmem:[#allocation1] sm:$0xff pattern:$0x75316420]
        %v230 = vld.sshfl [vmem:[#allocation1 + $0x8] sm:$0xff pattern:$0x75316420]
        %vm231 = vcmask 31744
        %v233 = vsel %vm231, %v219, 0
        %vm235 = vcmask 1043456
        %v236 = vsel %vm235, %v229, 0
        %v238 = vsel %vm235, %v230, 0
        %240 = vmatpush.msra.mxu0 0.0
        %241 = vmatpush.msra.mxu0 0.0
        %242 = vmatpush.msra.mxu0 0.0
        %243 = vmatpush.msra.mxu0 0.0
        %244 = vmatpush.msra.mxu0 0.0
        %245 = vmatpush.msra.mxu0 0.0
        %246 = vmatpush.msra.mxu0 0.0
        %247 = vmatpush.msra.mxu0 0.0
        %248 = vmatpush.msra.mxu0 0.0
        %249 = vmatpush.msra.mxu0 0.0
        %250 = vmatpush.msra.mxu0 0.0
        %251 = vmatpush.msra.mxu0 0.0
        %252 = vmatpush.msra.mxu0 0.0
        %253 = vmatpush.msra.mxu0 0.0
        %254 = vmatpush.msra.mxu0 0.0
        %255 = vmatpush.msra.mxu0 %v236
        %256 = vmatmul.f32.gmra.mxu0 %v233
        %v257 = vpop.f32.mrf.mxu0
        %v258 = vadd.f32 %v225, %v257
        %259 = vdwg.mxu0
        %260 = vmatpush.msra.mxu0 0.0
        %261 = vmatpush.msra.mxu0 0.0
        %262 = vmatpush.msra.mxu0 0.0
        %263 = vmatpush.msra.mxu0 0.0
        %264 = vmatpush.msra.mxu0 0.0
        %265 = vmatpush.msra.mxu0 0.0
        %266 = vmatpush.msra.mxu0 0.0
        %267 = vmatpush.msra.mxu0 0.0
        %268 = vmatpush.msra.mxu0 0.0
        %269 = vmatpush.msra.mxu0 0.0
        %270 = vmatpush.msra.mxu0 0.0
        %271 = vmatpush.msra.mxu0 0.0
        %272 = vmatpush.msra.mxu0 0.0
        %273 = vmatpush.msra.mxu0 0.0
        %274 = vmatpush.msra.mxu0 0.0
        %275 = vmatpush.msra.mxu0 %v238
        %276 = vmatmul.f32.gmra.mxu0 %v233
        %v277 = vpop.f32.mrf.mxu0
        %v278 = vadd.f32 %v225, %v277
        %279 = vdwg.mxu0
        %v282 = vrot.slane %v278, 4
        %v283 = vsel %vm235, %v258, %v282
        %285 = vst [vmem:[%s217] sm:$0x77] %v283
        %s286 = smul.u32 2, %s22
        %p287 = scmp.lt.s32.totalorder %s21, 1
        %s288 = scalar_select %p287, %s21, 1
        %p289 = scmp.lt.s32.totalorder %s286, 1
        %s290 = scalar_select %p289, %s286, 1
        %s291 = smul.addr %s288, 2
        %s292 = sadd.s32 %s290, %s291
        %s293 = smul.addr %s292, 4
        %s294 = scalar_lea.vmem %s3, %s293
        // Predicated region
        $region37: #{tpu_custom_call.1} parent=31 // pred_check
          %p295 = pneg %p119
        $region38: #{tpu_custom_call.1} parent=31 // pred_check_branch
          %297 = sbr.rel (%p295) target = $region40
        $region39: #{tpu_custom_call.1} parent=31 // pred_region
          %s298 = smul.u32 2, %s22
        $region40: #{tpu_custom_call.1} parent=31 // pred_fallthru
          _
      $region32: #{tpu_custom_call.1} parent=5 // pred_fallthru
        _
      %p299 = scmp.le.s32.totalorder 2, %s12
      // Predicated region
      $region41: #{tpu_custom_call.1} parent=5 // pred_check
        %p300 = pneg %p299
      $region42: #{tpu_custom_call.1} parent=5 // pred_check_branch
        %302 = sbr.rel (%p300) target = $region44
      $region43: #{tpu_custom_call.1} parent=5 // pred_region
        %s303 = ssub.s32 %s12, 2
        // Predicated region
        $region45: #{tpu_custom_call.1} parent=43 // pred_check
          %p304 = pneg %p125
        $region46: #{tpu_custom_call.1} parent=43 // pred_check_branch
          %306 = sbr.rel (%p304) target = $region48
        $region47: #{tpu_custom_call.1} parent=43 // pred_region
          %s307 = smul.u32 2, %s24
          %p308 = scmp.lt.s32.totalorder %s23, 1
          %s309 = scalar_select %p308, %s23, 1
          %p310 = scmp.lt.s32.totalorder %s307, 1
          %s311 = scalar_select %p310, %s307, 1
          %s312 = smul.addr %s309, 2
          %s313 = sadd.s32 %s311, %s312
          %s314 = smul.addr %s313, 4
          %s315 = scalar_lea.vmem %s3, %s314
        $region48: #{tpu_custom_call.1} parent=43 // pred_fallthru
          _
      $region44: #{tpu_custom_call.1} parent=5 // pred_fallthru
        _
    $region6: #{tpu_custom_call.1} parent=1 // loop_footer
      %s16 = sadd.s32 1, %s12
    $region7: #{tpu_custom_call.1} parent=1 // loop_footer_branch
      %11 = sbr.rel target = $region3
    $region8: #{tpu_custom_call.1} parent=1 // loop_exit
      _
    %316 = vsyncpa [#allocation3], 1
    %s317 = scalar_lea.sflag [#allocation3], 1
    %318 = vsyncpa %s317, 1

</llo_original>
